<compile_context>
chip_gen: v6e
topology: v6e:2x2x1
jax: 0.10.0
libtpu: 0.0.40
codegen_flags: <defaults>
</compile_context>

<pallas_src>
import functools

import jax
import jax.numpy as jnp
from jax.experimental import pallas as pl
from jax.experimental.pallas import tpu as pltpu


def _round_up(x, m):
    return ((x + m - 1) // m) * m


def _vmem_cap_bytes():
    """Per-generation VMEM ceiling: headroom under v7x's 64 MiB, more on v5e/v6e."""
    cap = 56 << 20  # conservative fallback fits every generation with headroom
    try:
        cap = max(cap, int(pltpu.get_tpu_info().vmem_capacity_bytes) - (16 << 20))
    except Exception:
        pass
    return cap


def _decoder_kernel(x_ref, w1_ref, b1_ref, g_ref, beta_ref, w2_ref, b2_ref,
                    o_ref, *, m_true):
    """One row-tile of: Linear -> LayerNorm -> Mish -> Linear."""
    # ---- Linear 1 (MXU, f32 accumulation; operands may be bf16) --------------
    h = jnp.dot(x_ref[...], w1_ref[...], preferred_element_type=jnp.float32)
    h = h + b1_ref[...]

    # ---- LayerNorm, one-pass stats over the TRUE width (eps = 1e-5) ----------
    # Pad lanes of h are exactly 0 (w1/b1 zero-padded), so unmasked sums already
    # equal the true-column sums; both statistics divide by the true width.
    inv_m = jnp.float32(1.0 / m_true)
    mu = jnp.sum(h, axis=-1, keepdims=True) * inv_m
    var = jnp.sum(h * h, axis=-1, keepdims=True) * inv_m - mu * mu
    hn = (h - mu) * jax.lax.rsqrt(var + 1e-5)
    hn = hn * g_ref[...] + beta_ref[...]        # pad lanes -> 0 (gamma/beta pad = 0)

    # ---- Mish: hn * tanh(softplus(hn)), softplus threshold 20 (PyTorch) ------
    # tanh(log t) == (t^2 - 1) / (t^2 + 1) with t = 1 + exp(hn); one exp + one
    # exact divide instead of exp + log1p + tanh + select.  For hn > 20 the
    # ratio saturates to 1 so mish == hn, matching the thresholded softplus.
    t = 1.0 + jnp.exp(jnp.minimum(hn, 20.0))
    t2 = t * t
    a = hn * ((t2 - 1.0) / (t2 + 1.0))           # pad lanes stay exactly 0

    # ---- Linear 2 -------------------------------------------------------------
    a = a.astype(w2_ref.dtype)
    z = jnp.dot(a, w2_ref[...], preferred_element_type=jnp.float32) + b2_ref[...]
    o_ref[...] = z.astype(o_ref.dtype)


def decoder_forward(x, params, n_agents, *, tile_n=512, matmul_dtype=None):
    """x: (B, n_agents, hidden_dim) -> (B * n_agents, dim).

    matmul_dtype: dtype fed to the MXU (e.g. jnp.bfloat16 for ~2-3x matmul
    throughput and half the weight/x VMEM+HBM bytes); None keeps x's dtype.
    Accumulation and LayerNorm/Mish math are always f32.
    """
    B, A, H = x.shape
    assert A == n_agents
    w1, b1, gamma, beta, w2, b2 = params
    M = w1.shape[1]
    D = w2.shape[1]
    N = B * A

    mm_dtype = jnp.dtype(matmul_dtype) if matmul_dtype is not None else x.dtype

    # Lane-dense feature padding (multiples of 128) for MXU / unmasked stores.
    M_pad = _round_up(M, 128)
    D_pad = _round_up(D, 128)
    # Pad H only when it is already large: a full-extent H block is legal, and
    # for tiny H the extra x HBM bytes outweigh the lane-density win.
    H_pad = _round_up(H, 128) if (H % 128 != 0 and H >= 128) else H

    # Row tile: multiple of 8 sublanes; clamp so the row grid has >= ~4 steps
    # when rows permit ("parallel" only shards v7x's 2 TCs if grid > 1 step).
    tile_n = min(int(tile_n), max(8, _round_up(pl.cdiv(N, 4), 8)))
    tile_n = max(8, _round_up(tile_n, 8))
    N_pad = _round_up(N, tile_n)

    x2d = x.reshape(N, H).astype(mm_dtype)
    if N_pad != N or H_pad != H:
        x2d = jnp.pad(x2d, ((0, N_pad - N), (0, H_pad - H)))

    pad_row = lambda v, P: jnp.pad(v.astype(jnp.float32), (0, P - v.shape[0])).reshape(1, P)
    w1p = jnp.pad(w1, ((0, H_pad - H), (0, M_pad - M))).astype(mm_dtype)
    w2p = jnp.pad(w2, ((0, M_pad - M), (0, D_pad - D))).astype(mm_dtype)
    b1r = pad_row(b1, M_pad)
    gr = pad_row(gamma, M_pad)
    br = pad_row(beta, M_pad)
    b2r = pad_row(b2, D_pad)

    grid = (N_pad // tile_n,)
    kernel = functools.partial(_decoder_kernel, m_true=M)
    out_shape = jax.ShapeDtypeStruct((N_pad, D_pad), x.dtype)

    def build_and_run(single_buffer_weights):
        res_kwargs = (
            dict(pipeline_mode=pl.Buffered(1)) if single_buffer_weights else {}
        )
        row_spec = lambda last: pl.BlockSpec((tile_n, last), lambda i: (i, 0))
        res_spec = lambda shape: pl.BlockSpec(
            shape, lambda i: (0,) * len(shape), **res_kwargs)

        # Honest VMEM budget (single-counted): double-buffered streamed tiles,
        # single- (or double-) buffered residents, f32 temporaries, 1.5x margin.
        mm_bpe = jnp.dtype(mm_dtype).itemsize
        out_bpe = jnp.dtype(x.dtype).itemsize
        wmul = 1 if single_buffer_weights else 2
        x_buf = 2 * tile_n * H_pad * mm_bpe
        o_buf = 2 * tile_n * D_pad * out_bpe
        w_buf = wmul * ((H_pad * M_pad + M_pad * D_pad) * mm_bpe
                        + (3 * M_pad + D_pad) * 4)
        tmp = 4 * tile_n * max(M_pad, D_pad) * 4
        budget = int(1.5 * (x_buf + o_buf + w_buf + tmp))
        vmem_bytes = int(min(_vmem_cap_bytes(), max(32 << 20, budget)))

        return pl.pallas_call(
            kernel,
            out_shape=out_shape,
            grid=grid,
            in_specs=[
                row_spec(H_pad),             # x tile (streamed / pipelined)
                res_spec((H_pad, M_pad)),    # w1 (resident)
                res_spec((1, M_pad)),        # b1
                res_spec((1, M_pad)),        # gamma
                res_spec((1, M_pad)),        # beta
                res_spec((M_pad, D_pad)),    # w2 (resident)
                res_spec((1, D_pad)),        # b2
            ],
            out_specs=row_spec(D_pad),       # lane-dense output tile
            compiler_params=pltpu.CompilerParams(
                dimension_semantics=("parallel",),
                vmem_limit_bytes=vmem_bytes,
            ),
        )(x2d, w1p, b1r, gr, br, w2p, b2r)

    try:
        out = build_and_run(True)
    except Exception:
        # pl.Buffered(1) not supported on this runtime -> default buffering.
        out = build_and_run(False)

    if N_pad == N and D_pad == D:
        return out
    return out[:N, :D]


def init_params(key, hidden_dim, dim):
    """Deterministic synthetic parameters matching the module's shapes."""
    mid = (hidden_dim + dim) // 2   # midmult=1.0 -> midpoint of in/out dims
    k1, k2, k3, k4 = jax.random.split(key, 4)
    lim1 = 1.0 / jnp.sqrt(hidden_dim)
    lim2 = 1.0 / jnp.sqrt(mid)
    w1 = jax.random.uniform(k1, (hidden_dim, mid), jnp.float32, -lim1, lim1)
    b1 = jax.random.uniform(k2, (mid,), jnp.float32, -lim1, lim1)
    gamma = jnp.ones((mid,), jnp.float32)   # LayerNorm weight
    beta = jnp.zeros((mid,), jnp.float32)   # LayerNorm bias
    w2 = jax.random.uniform(k3, (mid, dim), jnp.float32, -lim2, lim2)
    b2 = jax.random.uniform(k4, (dim,), jnp.float32, -lim2, lim2)
    return (w1, b1, gamma, beta, w2, b2)


def decoder_reference(x, params, n_agents):
    """Pure-JAX reference of the PyTorch forward, for correctness check."""
    w1, b1, gamma, beta, w2, b2 = params
    h = x @ w1 + b1
    mu = h.mean(-1, keepdims=True)
    var = ((h - mu) ** 2).mean(-1, keepdims=True)
    hn = (h - mu) / jnp.sqrt(var + 1e-5) * gamma + beta
    sp = jnp.where(hn > 20.0, hn, jnp.log1p(jnp.exp(jnp.minimum(hn, 20.0))))
    a = hn * jnp.tanh(sp)
    z = a @ w2 + b2
    return z.reshape(x.shape[0] * n_agents, -1)


if __name__ == "__main__":
    def _check(batch, n_agents, hidden_dim, dim, tile_n, matmul_dtype, atol, rtol):
        key = jax.random.PRNGKey(0)
        kx, kp = jax.random.split(key)
        x = jax.random.normal(kx, (batch, n_agents, hidden_dim), jnp.float32)
        params = init_params(kp, hidden_dim, dim)
        out = jax.block_until_ready(
            decoder_forward(x, params, n_agents, tile_n=tile_n,
                            matmul_dtype=matmul_dtype))
        ref = decoder_reference(x, params, n_agents)
        assert out.shape == (batch * n_agents, dim), out.shape
        err = float(jnp.max(jnp.abs(out - ref)))
        assert jnp.allclose(out, ref, atol=atol, rtol=rtol), f"max|diff|={err}"

    # f32 path, the small shape implied by the module: x is (B, n_agents, H).
    _check(batch=2, n_agents=4, hidden_dim=32, dim=16, tile_n=512,
           matmul_dtype=None, atol=1e-5, rtol=1e-5)
    # Multi-tile grid + feature-padding path (M=32 -> 128, D=24 -> 128), f32.
    _check(batch=6, n_agents=4, hidden_dim=40, dim=24, tile_n=8,
           matmul_dtype=None, atol=1e-5, rtol=1e-5)
    # bf16 MXU fast path (f32 accumulation, f32 LayerNorm/Mish), loose tolerance.
    _check(batch=6, n_agents=4, hidden_dim=40, dim=24, tile_n=8,
           matmul_dtype=jnp.bfloat16, atol=1e-1, rtol=1e-1)

    print("KERNEL_OK")
</pallas_src>

<mosaic_0001>
module attributes {stable_mosaic.version = 11 : i64} {
  func.func @_decoder_kernel(%arg0: i32, %arg1: memref<8x32xf32, #tpu.memory_space<vmem>>, %arg2: memref<32x128xf32, #tpu.memory_space<vmem>>, %arg3: memref<1x128xf32, #tpu.memory_space<vmem>>, %arg4: memref<1x128xf32, #tpu.memory_space<vmem>>, %arg5: memref<1x128xf32, #tpu.memory_space<vmem>>, %arg6: memref<128x128xf32, #tpu.memory_space<vmem>>, %arg7: memref<1x128xf32, #tpu.memory_space<vmem>>, %arg8: memref<8x128xf32, #tpu.memory_space<vmem>>) attributes {dimension_semantics = [#tpu.dimension_semantics<parallel>], iteration_bounds = array<i64: 1>, scalar_prefetch = 0 : i64, scratch_operands = 0 : i64, tpu.core_type = #tpu.core_type<tc>, window_params = [{transform_indices = @transform_0, window_bounds = array<i64: 8, 32>}, {pipeline_mode = #tpu.pipeline_mode<synchronous>, transform_indices = @transform_1, window_bounds = array<i64: 32, 128>}, {pipeline_mode = #tpu.pipeline_mode<synchronous>, transform_indices = @transform_2, window_bounds = array<i64: 1, 128>}, {pipeline_mode = #tpu.pipeline_mode<synchronous>, transform_indices = @transform_3, window_bounds = array<i64: 1, 128>}, {pipeline_mode = #tpu.pipeline_mode<synchronous>, transform_indices = @transform_4, window_bounds = array<i64: 1, 128>}, {pipeline_mode = #tpu.pipeline_mode<synchronous>, transform_indices = @transform_5, window_bounds = array<i64: 128, 128>}, {pipeline_mode = #tpu.pipeline_mode<synchronous>, transform_indices = @transform_6, window_bounds = array<i64: 1, 128>}, {transform_indices = @transform_7, window_bounds = array<i64: 8, 128>}]} {
    %c0 = arith.constant 0 : index
    %c0_0 = arith.constant 0 : index
    %0 = vector.load %arg1[%c0, %c0_0] : memref<8x32xf32, #tpu.memory_space<vmem>>, vector<8x32xf32>
    %c0_1 = arith.constant 0 : index
    %c0_2 = arith.constant 0 : index
    %1 = vector.load %arg2[%c0_1, %c0_2] : memref<32x128xf32, #tpu.memory_space<vmem>>, vector<32x128xf32>
    %cst = arith.constant dense<0.000000e+00> : vector<8x128xf32>
    %2 = tpu.matmul %0, %1, %cst {dimension_numbers = #tpu.dot_dimension_numbers<[1], [0], [0], [1], [0, 0, 1, 1], [], []>} : vector<8x32xf32>, vector<32x128xf32>, vector<8x128xf32> -> vector<8x128xf32>
    %c0_3 = arith.constant 0 : index
    %c0_4 = arith.constant 0 : index
    %3 = vector.load %arg3[%c0_3, %c0_4] : memref<1x128xf32, #tpu.memory_space<vmem>>, vector<1x128xf32>
    %4 = vector.broadcast %3 : vector<1x128xf32> to vector<8x128xf32>
    %5 = arith.addf %2, %4 : vector<8x128xf32>
    %cst_5 = arith.constant dense<0.000000e+00> : vector<8xf32>
    %6 = vector.multi_reduction <add>, %5, %cst_5 [1] : vector<8x128xf32> to vector<8xf32>
    %7 = vector.shape_cast %6 : vector<8xf32> to vector<8x1xf32>
    %cst_6 = arith.constant 0.0416666679 : f32
    %8 = vector.broadcast %cst_6 : f32 to vector<8x1xf32>
    %9 = arith.mulf %7, %8 : vector<8x1xf32>
    %10 = arith.mulf %5, %5 : vector<8x128xf32>
    %cst_7 = arith.constant dense<0.000000e+00> : vector<8xf32>
    %11 = vector.multi_reduction <add>, %10, %cst_7 [1] : vector<8x128xf32> to vector<8xf32>
    %12 = vector.shape_cast %11 : vector<8xf32> to vector<8x1xf32>
    %cst_8 = arith.constant 0.0416666679 : f32
    %13 = vector.broadcast %cst_8 : f32 to vector<8x1xf32>
    %14 = arith.mulf %12, %13 : vector<8x1xf32>
    %15 = arith.mulf %9, %9 : vector<8x1xf32>
    %16 = arith.subf %14, %15 : vector<8x1xf32>
    %17 = vector.broadcast %9 : vector<8x1xf32> to vector<8x128xf32>
    %18 = arith.subf %5, %17 : vector<8x128xf32>
    %cst_9 = arith.constant 9.99999974E-6 : f32
    %19 = vector.broadcast %cst_9 : f32 to vector<8x1xf32>
    %20 = arith.addf %16, %19 : vector<8x1xf32>
    %21 = math.rsqrt %20 : vector<8x1xf32>
    %22 = vector.broadcast %21 : vector<8x1xf32> to vector<8x128xf32>
    %23 = arith.mulf %18, %22 : vector<8x128xf32>
    %c0_10 = arith.constant 0 : index
    %c0_11 = arith.constant 0 : index
    %24 = vector.load %arg4[%c0_10, %c0_11] : memref<1x128xf32, #tpu.memory_space<vmem>>, vector<1x128xf32>
    %25 = vector.broadcast %24 : vector<1x128xf32> to vector<8x128xf32>
    %26 = arith.mulf %23, %25 : vector<8x128xf32>
    %c0_12 = arith.constant 0 : index
    %c0_13 = arith.constant 0 : index
    %27 = vector.load %arg5[%c0_12, %c0_13] : memref<1x128xf32, #tpu.memory_space<vmem>>, vector<1x128xf32>
    %28 = vector.broadcast %27 : vector<1x128xf32> to vector<8x128xf32>
    %29 = arith.addf %26, %28 : vector<8x128xf32>
    %cst_14 = arith.constant 2.000000e+01 : f32
    %30 = vector.broadcast %cst_14 : f32 to vector<8x128xf32>
    %31 = arith.minimumf %29, %30 : vector<8x128xf32>
    %32 = math.exp %31 : vector<8x128xf32>
    %cst_15 = arith.constant 1.000000e+00 : f32
    %33 = vector.broadcast %cst_15 : f32 to vector<8x128xf32>
    %34 = arith.addf %33, %32 : vector<8x128xf32>
    %35 = arith.mulf %34, %34 : vector<8x128xf32>
    %cst_16 = arith.constant 1.000000e+00 : f32
    %36 = vector.broadcast %cst_16 : f32 to vector<8x128xf32>
    %37 = arith.subf %35, %36 : vector<8x128xf32>
    %cst_17 = arith.constant 1.000000e+00 : f32
    %38 = vector.broadcast %cst_17 : f32 to vector<8x128xf32>
    %39 = arith.addf %35, %38 : vector<8x128xf32>
    %40 = arith.divf %37, %39 : vector<8x128xf32>
    %41 = arith.mulf %29, %40 : vector<8x128xf32>
    %c0_18 = arith.constant 0 : index
    %c0_19 = arith.constant 0 : index
    %42 = vector.load %arg6[%c0_18, %c0_19] : memref<128x128xf32, #tpu.memory_space<vmem>>, vector<128x128xf32>
    %cst_20 = arith.constant dense<0.000000e+00> : vector<8x128xf32>
    %43 = tpu.matmul %41, %42, %cst_20 {dimension_numbers = #tpu.dot_dimension_numbers<[1], [0], [0], [1], [0, 0, 1, 1], [], []>} : vector<8x128xf32>, vector<128x128xf32>, vector<8x128xf32> -> vector<8x128xf32>
    %c0_21 = arith.constant 0 : index
    %c0_22 = arith.constant 0 : index
    %44 = vector.load %arg7[%c0_21, %c0_22] : memref<1x128xf32, #tpu.memory_space<vmem>>, vector<1x128xf32>
    %45 = vector.broadcast %44 : vector<1x128xf32> to vector<8x128xf32>
    %46 = arith.addf %43, %45 : vector<8x128xf32>
    %c0_23 = arith.constant 0 : index
    %c0_24 = arith.constant 0 : index
    %47 = vector.load %arg8[%c0_23, %c0_24] : memref<8x128xf32, #tpu.memory_space<vmem>>, vector<8x128xf32>
    tpu.vector_store %arg8[%c0_23, %c0_24], %46 {strides = array<i32>} : memref<8x128xf32, #tpu.memory_space<vmem>>, vector<8x128xf32>,
    return
  }
  func.func @transform_0(%arg0: i32) -> (i32, i32) {
    %c0_i32 = arith.constant 0 : i32
    %c0_i32_0 = arith.constant 0 : i32
    return %arg0, %c0_i32 : i32, i32
  }
  func.func @transform_1(%arg0: i32) -> (i32, i32) {
    %c0_i32 = arith.constant 0 : i32
    %c0_i32_0 = arith.constant 0 : i32
    %c0_i32_1 = arith.constant 0 : i32
    return %c0_i32, %c0_i32_0 : i32, i32
  }
  func.func @transform_2(%arg0: i32) -> (i32, i32) {
    %c0_i32 = arith.constant 0 : i32
    %c0_i32_0 = arith.constant 0 : i32
    %c0_i32_1 = arith.constant 0 : i32
    return %c0_i32, %c0_i32_0 : i32, i32
  }
  func.func @transform_3(%arg0: i32) -> (i32, i32) {
    %c0_i32 = arith.constant 0 : i32
    %c0_i32_0 = arith.constant 0 : i32
    %c0_i32_1 = arith.constant 0 : i32
    return %c0_i32, %c0_i32_0 : i32, i32
  }
  func.func @transform_4(%arg0: i32) -> (i32, i32) {
    %c0_i32 = arith.constant 0 : i32
    %c0_i32_0 = arith.constant 0 : i32
    %c0_i32_1 = arith.constant 0 : i32
    return %c0_i32, %c0_i32_0 : i32, i32
  }
  func.func @transform_5(%arg0: i32) -> (i32, i32) {
    %c0_i32 = arith.constant 0 : i32
    %c0_i32_0 = arith.constant 0 : i32
    %c0_i32_1 = arith.constant 0 : i32
    return %c0_i32, %c0_i32_0 : i32, i32
  }
  func.func @transform_6(%arg0: i32) -> (i32, i32) {
    %c0_i32 = arith.constant 0 : i32
    %c0_i32_0 = arith.constant 0 : i32
    %c0_i32_1 = arith.constant 0 : i32
    return %c0_i32, %c0_i32_0 : i32, i32
  }
  func.func @transform_7(%arg0: i32) -> (i32, i32) {
    %c0_i32 = arith.constant 0 : i32
    %c0_i32_0 = arith.constant 0 : i32
    return %arg0, %c0_i32 : i32, i32
  }
}

module attributes {stable_mosaic.version = 11 : i64} {
  func.func @_decoder_kernel(%arg0: i32, %arg1: memref<8x32xf32, #tpu.memory_space<vmem>>, %arg2: memref<32x128xf32, #tpu.memory_space<vmem>>, %arg3: memref<1x128xf32, #tpu.memory_space<vmem>>, %arg4: memref<1x128xf32, #tpu.memory_space<vmem>>, %arg5: memref<1x128xf32, #tpu.memory_space<vmem>>, %arg6: memref<128x128xf32, #tpu.memory_space<vmem>>, %arg7: memref<1x128xf32, #tpu.memory_space<vmem>>, %arg8: memref<8x128xf32, #tpu.memory_space<vmem>>) attributes {dimension_semantics = [#tpu.dimension_semantics<parallel>], iteration_bounds = array<i64: 1>, scalar_prefetch = 0 : i64, scratch_operands = 0 : i64, tpu.core_type = #tpu.core_type<tc>, window_params = [{transform_indices = @transform_0, window_bounds = array<i64: 8, 32>}, {pipeline_mode = #tpu.pipeline_mode<synchronous>, transform_indices = @transform_1, window_bounds = array<i64: 32, 128>}, {pipeline_mode = #tpu.pipeline_mode<synchronous>, transform_indices = @transform_2, window_bounds = array<i64: 1, 128>}, {pipeline_mode = #tpu.pipeline_mode<synchronous>, transform_indices = @transform_3, window_bounds = array<i64: 1, 128>}, {pipeline_mode = #tpu.pipeline_mode<synchronous>, transform_indices = @transform_4, window_bounds = array<i64: 1, 128>}, {pipeline_mode = #tpu.pipeline_mode<synchronous>, transform_indices = @transform_5, window_bounds = array<i64: 128, 128>}, {pipeline_mode = #tpu.pipeline_mode<synchronous>, transform_indices = @transform_6, window_bounds = array<i64: 1, 128>}, {transform_indices = @transform_7, window_bounds = array<i64: 8, 128>}]} {
    %c0 = arith.constant 0 : index
    %c0_0 = arith.constant 0 : index
    %0 = vector.load %arg1[%c0, %c0_0] : memref<8x32xf32, #tpu.memory_space<vmem>>, vector<8x32xf32>
    %c0_1 = arith.constant 0 : index
    %c0_2 = arith.constant 0 : index
    %1 = vector.load %arg2[%c0_1, %c0_2] : memref<32x128xf32, #tpu.memory_space<vmem>>, vector<32x128xf32>
    %cst = arith.constant dense<0.000000e+00> : vector<8x128xf32>
    %2 = tpu.matmul %0, %1, %cst {dimension_numbers = #tpu.dot_dimension_numbers<[1], [0], [0], [1], [0, 0, 1, 1], [], []>} : vector<8x32xf32>, vector<32x128xf32>, vector<8x128xf32> -> vector<8x128xf32>
    %c0_3 = arith.constant 0 : index
    %c0_4 = arith.constant 0 : index
    %3 = vector.load %arg3[%c0_3, %c0_4] : memref<1x128xf32, #tpu.memory_space<vmem>>, vector<1x128xf32>
    %4 = vector.broadcast %3 : vector<1x128xf32> to vector<8x128xf32>
    %5 = arith.addf %2, %4 : vector<8x128xf32>
    %cst_5 = arith.constant dense<0.000000e+00> : vector<8xf32>
    %6 = vector.multi_reduction <add>, %5, %cst_5 [1] : vector<8x128xf32> to vector<8xf32>
    %7 = vector.shape_cast %6 : vector<8xf32> to vector<8x1xf32>
    %cst_6 = arith.constant 0.0416666679 : f32
    %8 = vector.broadcast %cst_6 : f32 to vector<8x1xf32>
    %9 = arith.mulf %7, %8 : vector<8x1xf32>
    %10 = arith.mulf %5, %5 : vector<8x128xf32>
    %cst_7 = arith.constant dense<0.000000e+00> : vector<8xf32>
    %11 = vector.multi_reduction <add>, %10, %cst_7 [1] : vector<8x128xf32> to vector<8xf32>
    %12 = vector.shape_cast %11 : vector<8xf32> to vector<8x1xf32>
    %cst_8 = arith.constant 0.0416666679 : f32
    %13 = vector.broadcast %cst_8 : f32 to vector<8x1xf32>
    %14 = arith.mulf %12, %13 : vector<8x1xf32>
    %15 = arith.mulf %9, %9 : vector<8x1xf32>
    %16 = arith.subf %14, %15 : vector<8x1xf32>
    %17 = vector.broadcast %9 : vector<8x1xf32> to vector<8x128xf32>
    %18 = arith.subf %5, %17 : vector<8x128xf32>
    %cst_9 = arith.constant 9.99999974E-6 : f32
    %19 = vector.broadcast %cst_9 : f32 to vector<8x1xf32>
    %20 = arith.addf %16, %19 : vector<8x1xf32>
    %21 = math.rsqrt %20 : vector<8x1xf32>
    %22 = vector.broadcast %21 : vector<8x1xf32> to vector<8x128xf32>
    %23 = arith.mulf %18, %22 : vector<8x128xf32>
    %c0_10 = arith.constant 0 : index
    %c0_11 = arith.constant 0 : index
    %24 = vector.load %arg4[%c0_10, %c0_11] : memref<1x128xf32, #tpu.memory_space<vmem>>, vector<1x128xf32>
    %25 = vector.broadcast %24 : vector<1x128xf32> to vector<8x128xf32>
    %26 = arith.mulf %23, %25 : vector<8x128xf32>
    %c0_12 = arith.constant 0 : index
    %c0_13 = arith.constant 0 : index
    %27 = vector.load %arg5[%c0_12, %c0_13] : memref<1x128xf32, #tpu.memory_space<vmem>>, vector<1x128xf32>
    %28 = vector.broadcast %27 : vector<1x128xf32> to vector<8x128xf32>
    %29 = arith.addf %26, %28 : vector<8x128xf32>
    %cst_14 = arith.constant 2.000000e+01 : f32
    %30 = vector.broadcast %cst_14 : f32 to vector<8x128xf32>
    %31 = arith.minimumf %29, %30 : vector<8x128xf32>
    %32 = math.exp %31 : vector<8x128xf32>
    %cst_15 = arith.constant 1.000000e+00 : f32
    %33 = vector.broadcast %cst_15 : f32 to vector<8x128xf32>
    %34 = arith.addf %33, %32 : vector<8x128xf32>
    %35 = arith.mulf %34, %34 : vector<8x128xf32>
    %cst_16 = arith.constant 1.000000e+00 : f32
    %36 = vector.broadcast %cst_16 : f32 to vector<8x128xf32>
    %37 = arith.subf %35, %36 : vector<8x128xf32>
    %cst_17 = arith.constant 1.000000e+00 : f32
    %38 = vector.broadcast %cst_17 : f32 to vector<8x128xf32>
    %39 = arith.addf %35, %38 : vector<8x128xf32>
    %40 = arith.divf %37, %39 : vector<8x128xf32>
    %41 = arith.mulf %29, %40 : vector<8x128xf32>
    %c0_18 = arith.constant 0 : index
    %c0_19 = arith.constant 0 : index
    %42 = vector.load %arg6[%c0_18, %c0_19] : memref<128x128xf32, #tpu.memory_space<vmem>>, vector<128x128xf32>
    %cst_20 = arith.constant dense<0.000000e+00> : vector<8x128xf32>
    %43 = tpu.matmul %41, %42, %cst_20 {dimension_numbers = #tpu.dot_dimension_numbers<[1], [0], [0], [1], [0, 0, 1, 1], [], []>} : vector<8x128xf32>, vector<128x128xf32>, vector<8x128xf32> -> vector<8x128xf32>
    %c0_21 = arith.constant 0 : index
    %c0_22 = arith.constant 0 : index
    %44 = vector.load %arg7[%c0_21, %c0_22] : memref<1x128xf32, #tpu.memory_space<vmem>>, vector<1x128xf32>
    %45 = vector.broadcast %44 : vector<1x128xf32> to vector<8x128xf32>
    %46 = arith.addf %43, %45 : vector<8x128xf32>
    %c0_23 = arith.constant 0 : index
    %c0_24 = arith.constant 0 : index
    %47 = vector.load %arg8[%c0_23, %c0_24] : memref<8x128xf32, #tpu.memory_space<vmem>>, vector<8x128xf32>
    tpu.vector_store %arg8[%c0_23, %c0_24], %46 {strides = array<i32>} : memref<8x128xf32, #tpu.memory_space<vmem>>, vector<8x128xf32>,
    return
  }
  func.func @transform_0(%arg0: i32) -> (i32, i32) {
    %c0_i32 = arith.constant 0 : i32
    %c0_i32_0 = arith.constant 0 : i32
    return %arg0, %c0_i32 : i32, i32
  }
  func.func @transform_1(%arg0: i32) -> (i32, i32) {
    %c0_i32 = arith.constant 0 : i32
    %c0_i32_0 = arith.constant 0 : i32
    %c0_i32_1 = arith.constant 0 : i32
    return %c0_i32, %c0_i32_0 : i32, i32
  }
  func.func @transform_2(%arg0: i32) -> (i32, i32) {
    %c0_i32 = arith.constant 0 : i32
    %c0_i32_0 = arith.constant 0 : i32
    %c0_i32_1 = arith.constant 0 : i32
    return %c0_i32, %c0_i32_0 : i32, i32
  }
  func.func @transform_3(%arg0: i32) -> (i32, i32) {
    %c0_i32 = arith.constant 0 : i32
    %c0_i32_0 = arith.constant 0 : i32
    %c0_i32_1 = arith.constant 0 : i32
    return %c0_i32, %c0_i32_0 : i32, i32
  }
  func.func @transform_4(%arg0: i32) -> (i32, i32) {
    %c0_i32 = arith.constant 0 : i32
    %c0_i32_0 = arith.constant 0 : i32
    %c0_i32_1 = arith.constant 0 : i32
    return %c0_i32, %c0_i32_0 : i32, i32
  }
  func.func @transform_5(%arg0: i32) -> (i32, i32) {
    %c0_i32 = arith.constant 0 : i32
    %c0_i32_0 = arith.constant 0 : i32
    %c0_i32_1 = arith.constant 0 : i32
    return %c0_i32, %c0_i32_0 : i32, i32
  }
  func.func @transform_6(%arg0: i32) -> (i32, i32) {
    %c0_i32 = arith.constant 0 : i32
    %c0_i32_0 = arith.constant 0 : i32
    %c0_i32_1 = arith.constant 0 : i32
    return %c0_i32, %c0_i32_0 : i32, i32
  }
  func.func @transform_7(%arg0: i32) -> (i32, i32) {
    %c0_i32 = arith.constant 0 : i32
    %c0_i32_0 = arith.constant 0 : i32
    return %arg0, %c0_i32 : i32, i32
  }
}

</mosaic_0001>

<llo_original>
// kernel: tpu_custom_call.1
$region0: #{tpu_custom_call.1}
  #allocation0 [shape = 'u32[]', space=smem, size = 0x4, offset = 0x4, fixed_abs, tag = 'smem constant byte address 0x4 - core index']
  #allocation1 [shape = 'u32[144,128]{1,0:T(1,128)}', space=vmem, size = 0x12000, scoped, tag = 'internal scratch']
  %s0 = inlined_call_operand.hbm [shape: f32[8,32], index: 0, kind: input, shape index: {}]
  %s1 = inlined_call_operand.hbm [shape: f32[32,128], index: 1, kind: input, shape index: {}]
  %s2 = inlined_call_operand.vmem [shape: f32[1,128], index: 2, kind: input, shape index: {}]
  %s3 = inlined_call_operand.vmem [shape: f32[1,128], index: 3, kind: input, shape index: {}]
  %s4 = inlined_call_operand.vmem [shape: f32[1,128], index: 4, kind: input, shape index: {}]
  %s5 = inlined_call_operand.hbm [shape: f32[128,128], index: 5, kind: input, shape index: {}]
  %s6 = inlined_call_operand.vmem [shape: f32[1,128], index: 6, kind: input, shape index: {}]
  %s7 = inlined_call_operand.hbm [shape: f32[8,128], index: 7, kind: output, shape index: {}]
  %s8 = sld [smem:[#allocation0]]
  $region50: #{tpu_custom_call.1} parent=0
    _
  %s10 = ssub.s32 1, %s8
  %s11 = scalar_select 0, %s10, %s8
  $region1: #{tpu_custom_call.1} parent=0
    #allocation2 [shape = 'u8[4096]{0}', space=vmem, size = 0x1000, scoped, tag = 'input window, operand 0, single buffered']
    #allocation3 [shape = 's32[1]{0}', space=sflag, size = 0x4, scoped, tag = 'scoped memory for tpu_custom_call.1']
    #allocation4 [shape = 's32[1]{0}', space=sflag, size = 0x4, scoped, tag = 'scoped memory for tpu_custom_call.1']
    #allocation5 [shape = 'u8[16384]{0}', space=vmem, size = 0x4000, scoped, tag = 'input window, operand 1, single buffered']
    #allocation6 [shape = 's32[1]{0}', space=sflag, size = 0x4, scoped, tag = 'scoped memory for tpu_custom_call.1']
    #allocation7 [shape = 'u8[65536]{0}', space=vmem, size = 0x10000, scoped, tag = 'input window, operand 5, single buffered']
    #allocation8 [shape = 'u8[4096]{0}', space=vmem, size = 0x1000, scoped, tag = 'output window, operand 0, single buffered']
    %12 = vsyncpa [#allocation3], 0
    %13 = vsyncpa [#allocation6], 0
    %14 = vsyncpa [#allocation4], 0
    // Predicated region
    $region2: #{tpu_custom_call.1} parent=1 // pred_check
      _
    $region3: #{tpu_custom_call.1} parent=1 // pred_check_branch
      %16 = sbr.rel (0) target = $region5
    $region4: #{tpu_custom_call.1} parent=1 // pred_region
      %s18 = ssub.s32 128, 128
      %19 = vsyncadd [#allocation3], %s18
      %s21 = sshll.u32 [#allocation2], 4
      %s22 = int_to_ptr.vmem [resolvable:$true] %s21
      %24 = dma.hbm_to_vmem [thread:$0]  %s0, 128, %s22, [#allocation3]
    $region5: #{tpu_custom_call.1} parent=1 // pred_fallthru
      _
    // Predicated region
    $region6: #{tpu_custom_call.1} parent=1 // pred_check
      _
    $region7: #{tpu_custom_call.1} parent=1 // pred_check_branch
      %26 = sbr.rel (0) target = $region9
    $region8: #{tpu_custom_call.1} parent=1 // pred_region
      %s28 = ssub.s32 512, 512
      %29 = vsyncadd [#allocation6], %s28
      %s30 = sshll.u32 [#allocation5], 4
      %s31 = int_to_ptr.vmem [resolvable:$true] %s30
      %36 = dma.hbm_to_vmem [thread:$0]  %s1, 512, %s31, [#allocation6], 128, 128, 8
    $region9: #{tpu_custom_call.1} parent=1 // pred_fallthru
      _
    // Predicated region
    $region10: #{tpu_custom_call.1} parent=1 // pred_check
      _
    $region11: #{tpu_custom_call.1} parent=1 // pred_check_branch
      %38 = sbr.rel (0) target = $region13
    $region12: #{tpu_custom_call.1} parent=1 // pred_region
      _
    $region13: #{tpu_custom_call.1} parent=1 // pred_fallthru
      _
    // Predicated region
    $region14: #{tpu_custom_call.1} parent=1 // pred_check
      _
    $region15: #{tpu_custom_call.1} parent=1 // pred_check_branch
      %40 = sbr.rel (0) target = $region17
    $region16: #{tpu_custom_call.1} parent=1 // pred_region
      _
    $region17: #{tpu_custom_call.1} parent=1 // pred_fallthru
      _
    // Predicated region
    $region18: #{tpu_custom_call.1} parent=1 // pred_check
      _
    $region19: #{tpu_custom_call.1} parent=1 // pred_check_branch
      %42 = sbr.rel (0) target = $region21
    $region20: #{tpu_custom_call.1} parent=1 // pred_region
      _
    $region21: #{tpu_custom_call.1} parent=1 // pred_fallthru
      _
    // Predicated region
    $region22: #{tpu_custom_call.1} parent=1 // pred_check
      _
    $region23: #{tpu_custom_call.1} parent=1 // pred_check_branch
      %44 = sbr.rel (0) target = $region25
    $region24: #{tpu_custom_call.1} parent=1 // pred_region
      %s46 = ssub.s32 2048, 2048
      %47 = vsyncadd [#allocation6], %s46
      %s48 = sshll.u32 [#allocation7], 4
      %s49 = int_to_ptr.vmem [resolvable:$true] %s48
      %54 = dma.hbm_to_vmem [thread:$0]  %s5, 2048, %s49, [#allocation6], 128, 128, 8
    $region25: #{tpu_custom_call.1} parent=1 // pred_fallthru
      _
    // Predicated region
    $region26: #{tpu_custom_call.1} parent=1 // pred_check
      _
    $region27: #{tpu_custom_call.1} parent=1 // pred_check_branch
      %56 = sbr.rel (0) target = $region29
    $region28: #{tpu_custom_call.1} parent=1 // pred_region
      _
    $region29: #{tpu_custom_call.1} parent=1 // pred_fallthru
      _
    // Predicated region
    $region30: #{tpu_custom_call.1} parent=1 // pred_check
      _
    $region31: #{tpu_custom_call.1} parent=1 // pred_check_branch
      %58 = sbr.rel (0) target = $region33
    $region32: #{tpu_custom_call.1} parent=1 // pred_region
      %59 = dma.done [#allocation3], 128
    $region33: #{tpu_custom_call.1} parent=1 // pred_fallthru
      _
    // Predicated region
    $region34: #{tpu_custom_call.1} parent=1 // pred_check
      _
    $region35: #{tpu_custom_call.1} parent=1 // pred_check_branch
      %61 = sbr.rel (0) target = $region37
    $region36: #{tpu_custom_call.1} parent=1 // pred_region
      %62 = dma.done [#allocation6], 512
    $region37: #{tpu_custom_call.1} parent=1 // pred_fallthru
      _
    // Predicated region
    $region38: #{tpu_custom_call.1} parent=1 // pred_check
      _
    $region39: #{tpu_custom_call.1} parent=1 // pred_check_branch
      %64 = sbr.rel (0) target = $region41
    $region40: #{tpu_custom_call.1} parent=1 // pred_region
      %65 = dma.done [#allocation6], 2048
    $region41: #{tpu_custom_call.1} parent=1 // pred_fallthru
      _
    %v66 = vld [vmem:[#allocation2] sm:$0xff]
    %v67 = vld [vmem:[#allocation5] sm:$0xff]
    %v68 = vld [vmem:[#allocation5 + $0x8] sm:$0xff]
    %v69 = vld [vmem:[#allocation5 + $0x10] sm:$0xff]
    %v70 = vld [vmem:[#allocation5 + $0x18] sm:$0xff]
    %v71 = vld [vmem:[%s2] sm:$0x1]
    %v73 = vlaneseq
    %v74 = vshrl.u32 %v73, 7
    %v75 = vsub.s32 0, %v74
    %v76 = vrot.slane %v71, %v75
    %vm78 = vcmask 261120
    %v80 = vsel %vm78, %v66, 0
    %82 = vmatprep.subr.mxu0 0.0
    %83 = vmatpush1.msra.mxu0 0.0
    %84 = vmatprep.subr.mxu0 0.0
    %85 = vmatpush1.msra.mxu0 0.0
    %86 = vmatprep.subr.mxu0 0.0
    %87 = vmatpush1.msra.mxu0 0.0
    %88 = vmatprep.subr.mxu0 0.0
    %89 = vmatpush1.msra.mxu0 0.0
    %90 = vmatprep.subr.mxu0 0.0
    %91 = vmatpush1.msra.mxu0 0.0
    %92 = vmatprep.subr.mxu0 0.0
    %93 = vmatpush1.msra.mxu0 0.0
    %94 = vmatprep.subr.mxu0 0.0
    %95 = vmatpush1.msra.mxu0 0.0
    %96 = vmatprep.subr.mxu0 0.0
    %97 = vmatpush1.msra.mxu0 0.0
    %98 = vmatprep.subr.mxu0 0.0
    %99 = vmatpush1.msra.mxu0 0.0
    %100 = vmatprep.subr.mxu0 0.0
    %101 = vmatpush1.msra.mxu0 0.0
    %102 = vmatprep.subr.mxu0 0.0
    %103 = vmatpush1.msra.mxu0 0.0
    %104 = vmatprep.subr.mxu0 0.0
    %105 = vmatpush1.msra.mxu0 0.0
    %106 = vmatprep.subr.mxu0 0.0
    %107 = vmatpush1.msra.mxu0 %v70
    %108 = vmatprep.subr.mxu0 0.0
    %109 = vmatpush1.msra.mxu0 %v69
    %110 = vmatprep.subr.mxu0 0.0
    %111 = vmatpush1.msra.mxu0 %v68
    %112 = vmatprep.subr.mxu0 0.0
    %113 = vmatpush1.msra.mxu0 %v67
    %114 = vmatprep.subr.mxu0 0.0
    %115 = vmatpush2.msra.mxu0 0.0
    %116 = vmatprep.subr.mxu0 0.0
    %117 = vmatpush2.msra.mxu0 0.0
    %118 = vmatprep.subr.mxu0 0.0
    %119 = vmatpush2.msra.mxu0 0.0
    %120 = vmatprep.subr.mxu0 0.0
    %121 = vmatpush2.msra.mxu0 0.0
    %122 = vmatprep.subr.mxu0 0.0
    %123 = vmatpush2.msra.mxu0 0.0
    %124 = vmatprep.subr.mxu0 0.0
    %125 = vmatpush2.msra.mxu0 0.0
    %126 = vmatprep.subr.mxu0 0.0
    %127 = vmatpush2.msra.mxu0 0.0
    %128 = vmatprep.subr.mxu0 0.0
    %129 = vmatpush2.msra.mxu0 0.0
    %130 = vmatprep.subr.mxu0 0.0
    %131 = vmatpush2.msra.mxu0 0.0
    %132 = vmatprep.subr.mxu0 0.0
    %133 = vmatpush2.msra.mxu0 0.0
    %134 = vmatprep.subr.mxu0 0.0
    %135 = vmatpush2.msra.mxu0 0.0
    %136 = vmatprep.subr.mxu0 0.0
    %137 = vmatpush2.msra.mxu0 0.0
    %138 = vmatprep.subr.mxu0 0.0
    %139 = vmatpush2.msra.mxu0 0.0
    %140 = vmatprep.subr.mxu0 0.0
    %141 = vmatpush2.msra.mxu0 0.0
    %142 = vmatprep.subr.mxu0 0.0
    %143 = vmatpush2.msra.mxu0 0.0
    %144 = vmatprep.subr.mxu0 0.0
    %145 = vmatpush2.msra.mxu0 0.0
    %146 = vmatprep.mubr.f32.mxu0 0.0
    %147 = vmatmul.mubr.f32.gmra.mxu0 %v80
    %v148 = vpop.f32.mrf.mxu0
    %v149 = vadd.f32 %v76, %v148
    %v150 = vpop.f32.mrf.mxu0
    %151 = vdwg.mxu0
    %152 = vadd.xlane.f32.xlu0 %v149
    %v153 = vpop.xlane.xlu0 %152
    %v154 = vmul.f32 %v153, 0.041666668
    %v155 = vmul.f32 %v149, %v149
    %156 = vadd.xlane.f32.xlu0 %v155
    %v157 = vpop.xlane.xlu0 %156
    %v158 = vmul.f32 %v157, 0.041666668
    %v159 = vmul.f32 %v154, %v154
    %v160 = vsub.f32 %v158, %v159
    %v161 = vsub.f32 %v149, %v154
    %v162 = vadd.f32 %v160, 1e-05
    %v163 = vrsqrt.pop %v162
    %v164 = vmul.f32 %v161, %v163
    %v165 = vld [vmem:[%s3] sm:$0x1]
    %v167 = vlaneseq
    %v168 = vshrl.u32 %v167, 7
    %v169 = vsub.s32 0, %v168
    %v170 = vrot.slane %v165, %v169
    %v172 = vmul.f32 %v164, %v170
    %v173 = vld [vmem:[%s4] sm:$0x1]
    %v175 = vlaneseq
    %v176 = vshrl.u32 %v175, 7
    %v177 = vsub.s32 0, %v176
    %v178 = vrot.slane %v173, %v177
    %v180 = vadd.f32 %v172, %v178
    %v181 = vmin.f32 %v180, 20.0
    %v182 = vmul.f32 %v181, 1.442695
    %v183 = vpow.pop %v182
    %v184 = vadd.f32 %v183, 1.0
    %v185 = vmul.f32 %v184, %v184
    %v186 = vsub.f32 %v185, 1.0
    %v187 = vadd.f32 %v185, 1.0
    %v188 = vrcp.pop %v187
    %v189 = vmul.f32 %v186, %v188
    %v190 = vmul.f32 %v180, %v189
    %v191 = vld [vmem:[#allocation7] sm:$0xff]
    %v192 = vld [vmem:[#allocation7 + $0x8] sm:$0xff]
    %v193 = vld [vmem:[#allocation7 + $0x10] sm:$0xff]
    %v194 = vld [vmem:[#allocation7 + $0x18] sm:$0xff]
    %v195 = vld [vmem:[#allocation7 + $0x20] sm:$0xff]
    %v196 = vld [vmem:[#allocation7 + $0x28] sm:$0xff]
    %v197 = vld [vmem:[#allocation7 + $0x30] sm:$0xff]
    %v198 = vld [vmem:[#allocation7 + $0x38] sm:$0xff]
    %v199 = vld [vmem:[#allocation7 + $0x40] sm:$0xff]
    %v200 = vld [vmem:[#allocation7 + $0x48] sm:$0xff]
    %v201 = vld [vmem:[#allocation7 + $0x50] sm:$0xff]
    %v202 = vld [vmem:[#allocation7 + $0x58] sm:$0xff]
    %v203 = vld [vmem:[#allocation7 + $0x60] sm:$0xff]
    %v204 = vld [vmem:[#allocation7 + $0x68] sm:$0xff]
    %v205 = vld [vmem:[#allocation7 + $0x70] sm:$0xff]
    %v206 = vld [vmem:[#allocation7 + $0x78] sm:$0xff]
    %v207 = vld [vmem:[%s6] sm:$0x1]
    %v209 = vlaneseq
    %v210 = vshrl.u32 %v209, 7
    %v211 = vsub.s32 0, %v210
    %v212 = vrot.slane %v207, %v211
    %214 = vmatprep.subr.mxu0 0.0
    %215 = vmatpush1.msra.mxu0 %v206
    %216 = vmatprep.subr.mxu0 0.0
    %217 = vmatpush1.msra.mxu0 %v205
    %218 = vmatprep.subr.mxu0 0.0
    %219 = vmatpush1.msra.mxu0 %v204
    %220 = vmatprep.subr.mxu0 0.0
    %221 = vmatpush1.msra.mxu0 %v203
    %222 = vmatprep.subr.mxu0 0.0
    %223 = vmatpush1.msra.mxu0 %v202
    %224 = vmatprep.subr.mxu0 0.0
    %225 = vmatpush1.msra.mxu0 %v201
    %226 = vmatprep.subr.mxu0 0.0
    %227 = vmatpush1.msra.mxu0 %v200
    %228 = vmatprep.subr.mxu0 0.0
    %229 = vmatpush1.msra.mxu0 %v199
    %230 = vmatprep.subr.mxu0 0.0
    %231 = vmatpush1.msra.mxu0 %v198
    %232 = vmatprep.subr.mxu0 0.0
    %233 = vmatpush1.msra.mxu0 %v197
    %234 = vmatprep.subr.mxu0 0.0
    %235 = vmatpush1.msra.mxu0 %v196
    %236 = vmatprep.subr.mxu0 0.0
    %237 = vmatpush1.msra.mxu0 %v195
    %238 = vmatprep.subr.mxu0 0.0
    %239 = vmatpush1.msra.mxu0 %v194
    %240 = vmatprep.subr.mxu0 0.0
    %241 = vmatpush1.msra.mxu0 %v193
    %242 = vmatprep.subr.mxu0 0.0
    %243 = vmatpush1.msra.mxu0 %v192
    %244 = vmatprep.subr.mxu0 0.0
    %245 = vmatpush1.msra.mxu0 %v191
    %246 = vmatprep.subr.mxu0 0.0
    %247 = vmatpush2.msra.mxu0 0.0
    %248 = vmatprep.subr.mxu0 0.0
    %249 = vmatpush2.msra.mxu0 0.0
    %250 = vmatprep.subr.mxu0 0.0
    %251 = vmatpush2.msra.mxu0 0.0
    %252 = vmatprep.subr.mxu0 0.0
    %253 = vmatpush2.msra.mxu0 0.0
    %254 = vmatprep.subr.mxu0 0.0
    %255 = vmatpush2.msra.mxu0 0.0
    %256 = vmatprep.subr.mxu0 0.0
    %257 = vmatpush2.msra.mxu0 0.0
    %258 = vmatprep.subr.mxu0 0.0
    %259 = vmatpush2.msra.mxu0 0.0
    %260 = vmatprep.subr.mxu0 0.0
    %261 = vmatpush2.msra.mxu0 0.0
    %262 = vmatprep.subr.mxu0 0.0
    %263 = vmatpush2.msra.mxu0 0.0
    %264 = vmatprep.subr.mxu0 0.0
    %265 = vmatpush2.msra.mxu0 0.0
    %266 = vmatprep.subr.mxu0 0.0
    %267 = vmatpush2.msra.mxu0 0.0
    %268 = vmatprep.subr.mxu0 0.0
    %269 = vmatpush2.msra.mxu0 0.0
    %270 = vmatprep.subr.mxu0 0.0
    %271 = vmatpush2.msra.mxu0 0.0
    %272 = vmatprep.subr.mxu0 0.0
    %273 = vmatpush2.msra.mxu0 0.0
    %274 = vmatprep.subr.mxu0 0.0
    %275 = vmatpush2.msra.mxu0 0.0
    %276 = vmatprep.subr.mxu0 0.0
    %277 = vmatpush2.msra.mxu0 0.0
    %278 = vmatprep.mubr.f32.mxu0 0.0
    %279 = vmatmul.mubr.f32.gmra.mxu0 %v190
    %v280 = vpop.f32.mrf.mxu0
    %v281 = vadd.f32 %v212, %v280
    %v282 = vpop.f32.mrf.mxu0
    %283 = vdwg.mxu0
    %284 = vst [vmem:[#allocation8] sm:$0xff] %v281
    // Predicated region
    $region42: #{tpu_custom_call.1} parent=1 // pred_check
      _
    $region43: #{tpu_custom_call.1} parent=1 // pred_check_branch
      %286 = sbr.rel (0) target = $region45
    $region44: #{tpu_custom_call.1} parent=1 // pred_region
      %s288 = ssub.s32 128, 128
      %289 = vsyncadd [#allocation4], %s288
      %s291 = sshll.u32 [#allocation8], 4
      %s292 = int_to_ptr.vmem [resolvable:$true] %s291
      %294 = dma.vmem_to_hbm [thread:$0]  %s292, 128, %s7, [#allocation4]
    $region45: #{tpu_custom_call.1} parent=1 // pred_fallthru
      _
    // Predicated region
    $region46: #{tpu_custom_call.1} parent=1 // pred_check
      _
    $region47: #{tpu_custom_call.1} parent=1 // pred_check_branch
      %296 = sbr.rel (0) target = $region49
    $region48: #{tpu_custom_call.1} parent=1 // pred_region
      %297 = dma.done [#allocation4], 128
    $region49: #{tpu_custom_call.1} parent=1 // pred_fallthru
      _
    %298 = vsyncpa [#allocation3], 1
    %299 = vsyncpa [#allocation6], 1
    %300 = vsyncpa [#allocation4], 1

// kernel: tpu_custom_call.1
$region0: #{tpu_custom_call.1}
  #allocation0 [shape = 'u32[]', space=smem, size = 0x4, offset = 0x4, fixed_abs, tag = 'smem constant byte address 0x4 - core index']
  #allocation1 [shape = 'u32[144,128]{1,0:T(1,128)}', space=vmem, size = 0x12000, scoped, tag = 'internal scratch']
  %s0 = inlined_call_operand.hbm [shape: f32[8,32], index: 0, kind: input, shape index: {}]
  %s1 = inlined_call_operand.hbm [shape: f32[32,128], index: 1, kind: input, shape index: {}]
  %s2 = inlined_call_operand.vmem [shape: f32[1,128], index: 2, kind: input, shape index: {}]
  %s3 = inlined_call_operand.vmem [shape: f32[1,128], index: 3, kind: input, shape index: {}]
  %s4 = inlined_call_operand.vmem [shape: f32[1,128], index: 4, kind: input, shape index: {}]
  %s5 = inlined_call_operand.hbm [shape: f32[128,128], index: 5, kind: input, shape index: {}]
  %s6 = inlined_call_operand.vmem [shape: f32[1,128], index: 6, kind: input, shape index: {}]
  %s7 = inlined_call_operand.hbm [shape: f32[8,128], index: 7, kind: output, shape index: {}]
  %s8 = sld [smem:[#allocation0]]
  $region50: #{tpu_custom_call.1} parent=0
    _
  %s10 = ssub.s32 1, %s8
  %s11 = scalar_select 0, %s10, %s8
  $region1: #{tpu_custom_call.1} parent=0
    #allocation2 [shape = 'u8[4096]{0}', space=vmem, size = 0x1000, scoped, tag = 'input window, operand 0, single buffered']
    #allocation3 [shape = 's32[1]{0}', space=sflag, size = 0x4, scoped, tag = 'scoped memory for tpu_custom_call.1']
    #allocation4 [shape = 's32[1]{0}', space=sflag, size = 0x4, scoped, tag = 'scoped memory for tpu_custom_call.1']
    #allocation5 [shape = 'u8[16384]{0}', space=vmem, size = 0x4000, scoped, tag = 'input window, operand 1, single buffered']
    #allocation6 [shape = 's32[1]{0}', space=sflag, size = 0x4, scoped, tag = 'scoped memory for tpu_custom_call.1']
    #allocation7 [shape = 'u8[65536]{0}', space=vmem, size = 0x10000, scoped, tag = 'input window, operand 5, single buffered']
    #allocation8 [shape = 'u8[4096]{0}', space=vmem, size = 0x1000, scoped, tag = 'output window, operand 0, single buffered']
    %12 = vsyncpa [#allocation3], 0
    %13 = vsyncpa [#allocation6], 0
    %14 = vsyncpa [#allocation4], 0
    // Predicated region
    $region2: #{tpu_custom_call.1} parent=1 // pred_check
      _
    $region3: #{tpu_custom_call.1} parent=1 // pred_check_branch
      %16 = sbr.rel (0) target = $region5
    $region4: #{tpu_custom_call.1} parent=1 // pred_region
      %s18 = ssub.s32 128, 128
      %19 = vsyncadd [#allocation3], %s18
      %s21 = sshll.u32 [#allocation2], 4
      %s22 = int_to_ptr.vmem [resolvable:$true] %s21
      %24 = dma.hbm_to_vmem [thread:$0]  %s0, 128, %s22, [#allocation3]
    $region5: #{tpu_custom_call.1} parent=1 // pred_fallthru
      _
    // Predicated region
    $region6: #{tpu_custom_call.1} parent=1 // pred_check
      _
    $region7: #{tpu_custom_call.1} parent=1 // pred_check_branch
      %26 = sbr.rel (0) target = $region9
    $region8: #{tpu_custom_call.1} parent=1 // pred_region
      %s28 = ssub.s32 512, 512
      %29 = vsyncadd [#allocation6], %s28
      %s30 = sshll.u32 [#allocation5], 4
      %s31 = int_to_ptr.vmem [resolvable:$true] %s30
      %36 = dma.hbm_to_vmem [thread:$0]  %s1, 512, %s31, [#allocation6], 128, 128, 8
    $region9: #{tpu_custom_call.1} parent=1 // pred_fallthru
      _
    // Predicated region
    $region10: #{tpu_custom_call.1} parent=1 // pred_check
      _
    $region11: #{tpu_custom_call.1} parent=1 // pred_check_branch
      %38 = sbr.rel (0) target = $region13
    $region12: #{tpu_custom_call.1} parent=1 // pred_region
      _
    $region13: #{tpu_custom_call.1} parent=1 // pred_fallthru
      _
    // Predicated region
    $region14: #{tpu_custom_call.1} parent=1 // pred_check
      _
    $region15: #{tpu_custom_call.1} parent=1 // pred_check_branch
      %40 = sbr.rel (0) target = $region17
    $region16: #{tpu_custom_call.1} parent=1 // pred_region
      _
    $region17: #{tpu_custom_call.1} parent=1 // pred_fallthru
      _
    // Predicated region
    $region18: #{tpu_custom_call.1} parent=1 // pred_check
      _
    $region19: #{tpu_custom_call.1} parent=1 // pred_check_branch
      %42 = sbr.rel (0) target = $region21
    $region20: #{tpu_custom_call.1} parent=1 // pred_region
      _
    $region21: #{tpu_custom_call.1} parent=1 // pred_fallthru
      _
    // Predicated region
    $region22: #{tpu_custom_call.1} parent=1 // pred_check
      _
    $region23: #{tpu_custom_call.1} parent=1 // pred_check_branch
      %44 = sbr.rel (0) target = $region25
    $region24: #{tpu_custom_call.1} parent=1 // pred_region
      %s46 = ssub.s32 2048, 2048
      %47 = vsyncadd [#allocation6], %s46
      %s48 = sshll.u32 [#allocation7], 4
      %s49 = int_to_ptr.vmem [resolvable:$true] %s48
      %54 = dma.hbm_to_vmem [thread:$0]  %s5, 2048, %s49, [#allocation6], 128, 128, 8
    $region25: #{tpu_custom_call.1} parent=1 // pred_fallthru
      _
    // Predicated region
    $region26: #{tpu_custom_call.1} parent=1 // pred_check
      _
    $region27: #{tpu_custom_call.1} parent=1 // pred_check_branch
      %56 = sbr.rel (0) target = $region29
    $region28: #{tpu_custom_call.1} parent=1 // pred_region
      _
    $region29: #{tpu_custom_call.1} parent=1 // pred_fallthru
      _
    // Predicated region
    $region30: #{tpu_custom_call.1} parent=1 // pred_check
      _
    $region31: #{tpu_custom_call.1} parent=1 // pred_check_branch
      %58 = sbr.rel (0) target = $region33
    $region32: #{tpu_custom_call.1} parent=1 // pred_region
      %59 = dma.done [#allocation3], 128
    $region33: #{tpu_custom_call.1} parent=1 // pred_fallthru
      _
    // Predicated region
    $region34: #{tpu_custom_call.1} parent=1 // pred_check
      _
    $region35: #{tpu_custom_call.1} parent=1 // pred_check_branch
      %61 = sbr.rel (0) target = $region37
    $region36: #{tpu_custom_call.1} parent=1 // pred_region
      %62 = dma.done [#allocation6], 512
    $region37: #{tpu_custom_call.1} parent=1 // pred_fallthru
      _
    // Predicated region
    $region38: #{tpu_custom_call.1} parent=1 // pred_check
      _
    $region39: #{tpu_custom_call.1} parent=1 // pred_check_branch
      %64 = sbr.rel (0) target = $region41
    $region40: #{tpu_custom_call.1} parent=1 // pred_region
      %65 = dma.done [#allocation6], 2048
    $region41: #{tpu_custom_call.1} parent=1 // pred_fallthru
      _
    %v66 = vld [vmem:[#allocation2] sm:$0xff]
    %v67 = vld [vmem:[#allocation5] sm:$0xff]
    %v68 = vld [vmem:[#allocation5 + $0x8] sm:$0xff]
    %v69 = vld [vmem:[#allocation5 + $0x10] sm:$0xff]
    %v70 = vld [vmem:[#allocation5 + $0x18] sm:$0xff]
    %v71 = vld [vmem:[%s2] sm:$0x1]
    %v73 = vlaneseq
    %v74 = vshrl.u32 %v73, 7
    %v75 = vsub.s32 0, %v74
    %v76 = vrot.slane %v71, %v75
    %vm78 = vcmask 261120
    %v80 = vsel %vm78, %v66, 0
    %82 = vmatprep.subr.mxu0 0.0
    %83 = vmatpush1.msra.mxu0 0.0
    %84 = vmatprep.subr.mxu0 0.0
    %85 = vmatpush1.msra.mxu0 0.0
    %86 = vmatprep.subr.mxu0 0.0
    %87 = vmatpush1.msra.mxu0 0.0
    %88 = vmatprep.subr.mxu0 0.0
    %89 = vmatpush1.msra.mxu0 0.0
    %90 = vmatprep.subr.mxu0 0.0
    %91 = vmatpush1.msra.mxu0 0.0
    %92 = vmatprep.subr.mxu0 0.0
    %93 = vmatpush1.msra.mxu0 0.0
    %94 = vmatprep.subr.mxu0 0.0
    %95 = vmatpush1.msra.mxu0 0.0
    %96 = vmatprep.subr.mxu0 0.0
    %97 = vmatpush1.msra.mxu0 0.0
    %98 = vmatprep.subr.mxu0 0.0
    %99 = vmatpush1.msra.mxu0 0.0
    %100 = vmatprep.subr.mxu0 0.0
    %101 = vmatpush1.msra.mxu0 0.0
    %102 = vmatprep.subr.mxu0 0.0
    %103 = vmatpush1.msra.mxu0 0.0
    %104 = vmatprep.subr.mxu0 0.0
    %105 = vmatpush1.msra.mxu0 0.0
    %106 = vmatprep.subr.mxu0 0.0
    %107 = vmatpush1.msra.mxu0 %v70
    %108 = vmatprep.subr.mxu0 0.0
    %109 = vmatpush1.msra.mxu0 %v69
    %110 = vmatprep.subr.mxu0 0.0
    %111 = vmatpush1.msra.mxu0 %v68
    %112 = vmatprep.subr.mxu0 0.0
    %113 = vmatpush1.msra.mxu0 %v67
    %114 = vmatprep.subr.mxu0 0.0
    %115 = vmatpush2.msra.mxu0 0.0
    %116 = vmatprep.subr.mxu0 0.0
    %117 = vmatpush2.msra.mxu0 0.0
    %118 = vmatprep.subr.mxu0 0.0
    %119 = vmatpush2.msra.mxu0 0.0
    %120 = vmatprep.subr.mxu0 0.0
    %121 = vmatpush2.msra.mxu0 0.0
    %122 = vmatprep.subr.mxu0 0.0
    %123 = vmatpush2.msra.mxu0 0.0
    %124 = vmatprep.subr.mxu0 0.0
    %125 = vmatpush2.msra.mxu0 0.0
    %126 = vmatprep.subr.mxu0 0.0
    %127 = vmatpush2.msra.mxu0 0.0
    %128 = vmatprep.subr.mxu0 0.0
    %129 = vmatpush2.msra.mxu0 0.0
    %130 = vmatprep.subr.mxu0 0.0
    %131 = vmatpush2.msra.mxu0 0.0
    %132 = vmatprep.subr.mxu0 0.0
    %133 = vmatpush2.msra.mxu0 0.0
    %134 = vmatprep.subr.mxu0 0.0
    %135 = vmatpush2.msra.mxu0 0.0
    %136 = vmatprep.subr.mxu0 0.0
    %137 = vmatpush2.msra.mxu0 0.0
    %138 = vmatprep.subr.mxu0 0.0
    %139 = vmatpush2.msra.mxu0 0.0
    %140 = vmatprep.subr.mxu0 0.0
    %141 = vmatpush2.msra.mxu0 0.0
    %142 = vmatprep.subr.mxu0 0.0
    %143 = vmatpush2.msra.mxu0 0.0
    %144 = vmatprep.subr.mxu0 0.0
    %145 = vmatpush2.msra.mxu0 0.0
    %146 = vmatprep.mubr.f32.mxu0 0.0
    %147 = vmatmul.mubr.f32.gmra.mxu0 %v80
    %v148 = vpop.f32.mrf.mxu0
    %v149 = vadd.f32 %v76, %v148
    %v150 = vpop.f32.mrf.mxu0
    %151 = vdwg.mxu0
    %152 = vadd.xlane.f32.xlu0 %v149
    %v153 = vpop.xlane.xlu0 %152
    %v154 = vmul.f32 %v153, 0.041666668
    %v155 = vmul.f32 %v149, %v149
    %156 = vadd.xlane.f32.xlu0 %v155
    %v157 = vpop.xlane.xlu0 %156
    %v158 = vmul.f32 %v157, 0.041666668
    %v159 = vmul.f32 %v154, %v154
    %v160 = vsub.f32 %v158, %v159
    %v161 = vsub.f32 %v149, %v154
    %v162 = vadd.f32 %v160, 1e-05
    %v163 = vrsqrt.pop %v162
    %v164 = vmul.f32 %v161, %v163
    %v165 = vld [vmem:[%s3] sm:$0x1]
    %v167 = vlaneseq
    %v168 = vshrl.u32 %v167, 7
    %v169 = vsub.s32 0, %v168
    %v170 = vrot.slane %v165, %v169
    %v172 = vmul.f32 %v164, %v170
    %v173 = vld [vmem:[%s4] sm:$0x1]
    %v175 = vlaneseq
    %v176 = vshrl.u32 %v175, 7
    %v177 = vsub.s32 0, %v176
    %v178 = vrot.slane %v173, %v177
    %v180 = vadd.f32 %v172, %v178
    %v181 = vmin.f32 %v180, 20.0
    %v182 = vmul.f32 %v181, 1.442695
    %v183 = vpow.pop %v182
    %v184 = vadd.f32 %v183, 1.0
    %v185 = vmul.f32 %v184, %v184
    %v186 = vsub.f32 %v185, 1.0
    %v187 = vadd.f32 %v185, 1.0
    %v188 = vrcp.pop %v187
    %v189 = vmul.f32 %v186, %v188
    %v190 = vmul.f32 %v180, %v189
    %v191 = vld [vmem:[#allocation7] sm:$0xff]
    %v192 = vld [vmem:[#allocation7 + $0x8] sm:$0xff]
    %v193 = vld [vmem:[#allocation7 + $0x10] sm:$0xff]
    %v194 = vld [vmem:[#allocation7 + $0x18] sm:$0xff]
    %v195 = vld [vmem:[#allocation7 + $0x20] sm:$0xff]
    %v196 = vld [vmem:[#allocation7 + $0x28] sm:$0xff]
    %v197 = vld [vmem:[#allocation7 + $0x30] sm:$0xff]
    %v198 = vld [vmem:[#allocation7 + $0x38] sm:$0xff]
    %v199 = vld [vmem:[#allocation7 + $0x40] sm:$0xff]
    %v200 = vld [vmem:[#allocation7 + $0x48] sm:$0xff]
    %v201 = vld [vmem:[#allocation7 + $0x50] sm:$0xff]
    %v202 = vld [vmem:[#allocation7 + $0x58] sm:$0xff]
    %v203 = vld [vmem:[#allocation7 + $0x60] sm:$0xff]
    %v204 = vld [vmem:[#allocation7 + $0x68] sm:$0xff]
    %v205 = vld [vmem:[#allocation7 + $0x70] sm:$0xff]
    %v206 = vld [vmem:[#allocation7 + $0x78] sm:$0xff]
    %v207 = vld [vmem:[%s6] sm:$0x1]
    %v209 = vlaneseq
    %v210 = vshrl.u32 %v209, 7
    %v211 = vsub.s32 0, %v210
    %v212 = vrot.slane %v207, %v211
    %214 = vmatprep.subr.mxu0 0.0
    %215 = vmatpush1.msra.mxu0 %v206
    %216 = vmatprep.subr.mxu0 0.0
    %217 = vmatpush1.msra.mxu0 %v205
    %218 = vmatprep.subr.mxu0 0.0
    %219 = vmatpush1.msra.mxu0 %v204
    %220 = vmatprep.subr.mxu0 0.0
    %221 = vmatpush1.msra.mxu0 %v203
    %222 = vmatprep.subr.mxu0 0.0
    %223 = vmatpush1.msra.mxu0 %v202
    %224 = vmatprep.subr.mxu0 0.0
    %225 = vmatpush1.msra.mxu0 %v201
    %226 = vmatprep.subr.mxu0 0.0
    %227 = vmatpush1.msra.mxu0 %v200
    %228 = vmatprep.subr.mxu0 0.0
    %229 = vmatpush1.msra.mxu0 %v199
    %230 = vmatprep.subr.mxu0 0.0
    %231 = vmatpush1.msra.mxu0 %v198
    %232 = vmatprep.subr.mxu0 0.0
    %233 = vmatpush1.msra.mxu0 %v197
    %234 = vmatprep.subr.mxu0 0.0
    %235 = vmatpush1.msra.mxu0 %v196
    %236 = vmatprep.subr.mxu0 0.0
    %237 = vmatpush1.msra.mxu0 %v195
    %238 = vmatprep.subr.mxu0 0.0
    %239 = vmatpush1.msra.mxu0 %v194
    %240 = vmatprep.subr.mxu0 0.0
    %241 = vmatpush1.msra.mxu0 %v193
    %242 = vmatprep.subr.mxu0 0.0
    %243 = vmatpush1.msra.mxu0 %v192
    %244 = vmatprep.subr.mxu0 0.0
    %245 = vmatpush1.msra.mxu0 %v191
    %246 = vmatprep.subr.mxu0 0.0
    %247 = vmatpush2.msra.mxu0 0.0
    %248 = vmatprep.subr.mxu0 0.0
    %249 = vmatpush2.msra.mxu0 0.0
    %250 = vmatprep.subr.mxu0 0.0
    %251 = vmatpush2.msra.mxu0 0.0
    %252 = vmatprep.subr.mxu0 0.0
    %253 = vmatpush2.msra.mxu0 0.0
    %254 = vmatprep.subr.mxu0 0.0
    %255 = vmatpush2.msra.mxu0 0.0
    %256 = vmatprep.subr.mxu0 0.0
    %257 = vmatpush2.msra.mxu0 0.0
    %258 = vmatprep.subr.mxu0 0.0
    %259 = vmatpush2.msra.mxu0 0.0
    %260 = vmatprep.subr.mxu0 0.0
    %261 = vmatpush2.msra.mxu0 0.0
    %262 = vmatprep.subr.mxu0 0.0
    %263 = vmatpush2.msra.mxu0 0.0
    %264 = vmatprep.subr.mxu0 0.0
    %265 = vmatpush2.msra.mxu0 0.0
    %266 = vmatprep.subr.mxu0 0.0
    %267 = vmatpush2.msra.mxu0 0.0
    %268 = vmatprep.subr.mxu0 0.0
    %269 = vmatpush2.msra.mxu0 0.0
    %270 = vmatprep.subr.mxu0 0.0
    %271 = vmatpush2.msra.mxu0 0.0
    %272 = vmatprep.subr.mxu0 0.0
    %273 = vmatpush2.msra.mxu0 0.0
    %274 = vmatprep.subr.mxu0 0.0
    %275 = vmatpush2.msra.mxu0 0.0
    %276 = vmatprep.subr.mxu0 0.0
    %277 = vmatpush2.msra.mxu0 0.0
    %278 = vmatprep.mubr.f32.mxu0 0.0
    %279 = vmatmul.mubr.f32.gmra.mxu0 %v190
    %v280 = vpop.f32.mrf.mxu0
    %v281 = vadd.f32 %v212, %v280
    %v282 = vpop.f32.mrf.mxu0
    %283 = vdwg.mxu0
    %284 = vst [vmem:[#allocation8] sm:$0xff] %v281
    // Predicated region
    $region42: #{tpu_custom_call.1} parent=1 // pred_check
      _
    $region43: #{tpu_custom_call.1} parent=1 // pred_check_branch
      %286 = sbr.rel (0) target = $region45
    $region44: #{tpu_custom_call.1} parent=1 // pred_region
      %s288 = ssub.s32 128, 128
      %289 = vsyncadd [#allocation4], %s288
      %s291 = sshll.u32 [#allocation8], 4
      %s292 = int_to_ptr.vmem [resolvable:$true] %s291
      %294 = dma.vmem_to_hbm [thread:$0]  %s292, 128, %s7, [#allocation4]
    $region45: #{tpu_custom_call.1} parent=1 // pred_fallthru
      _
    // Predicated region
    $region46: #{tpu_custom_call.1} parent=1 // pred_check
      _
    $region47: #{tpu_custom_call.1} parent=1 // pred_check_branch
      %296 = sbr.rel (0) target = $region49
    $region48: #{tpu_custom_call.1} parent=1 // pred_region
      %297 = dma.done [#allocation4], 128
    $region49: #{tpu_custom_call.1} parent=1 // pred_fallthru
      _
    %298 = vsyncpa [#allocation3], 1
    %299 = vsyncpa [#allocation6], 1
    %300 = vsyncpa [#allocation4], 1

</llo_original>
